<compile_context>
chip_gen: v5e
topology: v5e:2x2
jax: 0.10.0
libtpu: 0.0.40
codegen_flags: <defaults>
</compile_context>

<pallas_src>
import functools

import jax
import jax.numpy as jnp
from jax import lax
from jax.experimental import pallas as pl
from jax.experimental.pallas import tpu as pltpu


def _conv_bias_relu_kernel(x_ref, w_ref, bo_ref, o_ref):
    """Fused conv-as-matmul + bias + relu, single invocation (no grid).

    x_ref:  (N*H, KH*(W+2)*Cin)   bf16 im2row LHS (wrapper-built).
    w_ref:  (KH*(W+2)*Cin, W*Cout) bf16 stacked banded conv-weight slab.
    bo_ref: (N*H, W*Cout)         f32 precombined conv bias + extra bias + other.
    o_ref:  (N*H, W*Cout)         f32 lane-dense output rows.
    """
    acc = jnp.dot(x_ref[...], w_ref[...], preferred_element_type=jnp.float32)
    o_ref[...] = jnp.maximum(acc + bo_ref[...], 0.0).astype(o_ref.dtype)


def prepare_params(conv_w_oihw, conv_b, extra_bias, W_sp,
                   compute_dtype=jnp.bfloat16):
    """One-time parameter prep (hoisted out of the per-call forward path).

    Returns:
      w_slab: (KH*(W_sp+2)*Cin, W_sp*Cout) stacked banded slab such that
              im2row(x_pad) @ w_slab == conv2d(x, w, stride=1, padding=1)
              in lane-dense (n*h, w*cout) row layout.
      bias:   (Cout,) f32 combined conv bias + extra learned bias.
    """
    Cout, Cin, KH, KW = conv_w_oihw.shape
    assert KH == 3 and KW == 3, "banded slab assumes 3x3, stride=1, padding=1"
    P = W_sp + 2
    w_hwio = jnp.transpose(conv_w_oihw, (2, 3, 1, 0))          # (KH, KW, Cin, Cout)
    slabs = []
    for dy in range(KH):
        m = jnp.zeros((P * Cin, W_sp * Cout), conv_w_oihw.dtype)
        for dx in range(KW):
            sel = jnp.eye(P, W_sp, k=-dx, dtype=conv_w_oihw.dtype)  # sel[w+dx, w] = 1
            m = m + jnp.einsum('pw,ic->piwc', sel, w_hwio[dy, dx]
                               ).reshape(P * Cin, W_sp * Cout)
        slabs.append(m)
    w_slab = jnp.concatenate(slabs, axis=0).astype(compute_dtype)   # (KH*P*Cin, W*Cout)
    bias = (conv_b + extra_bias.reshape(-1)).astype(jnp.float32)    # (Cout,)
    return w_slab, bias


@jax.jit
def model_forward(x_nchw, other_nchw, w_slab, bias):
    """relu(conv2d(x, 3x3, s=1, p=1) + conv_bias + bias + other).  NCHW in/out."""
    N, Cin, H, W = x_nchw.shape
    Cout = bias.shape[0]
    KH = 3
    K, WC = w_slab.shape
    assert WC == W * Cout and K == KH * (W + 2) * Cin, "slab/shape mismatch"

    compute_dtype = w_slab.dtype

    # --- im2row LHS: (N*H, KH*(W+2)*Cin), built with a few tiny XLA ops. ---
    x_nhwc = jnp.transpose(x_nchw, (0, 2, 3, 1)).astype(compute_dtype)
    x_pad = jnp.pad(x_nhwc, ((0, 0), (1, 1), (1, 1), (0, 0)))
    x_rows = x_pad.reshape(N, H + 2, (W + 2) * Cin)
    x_im2row = jnp.concatenate(
        [x_rows[:, dy:dy + H, :] for dy in range(KH)], axis=-1
    ).reshape(N * H, K)

    # --- precombined bias + `other` term, lane-dense (N*H, W*Cout), f32. ---
    Nb = other_nchw.shape[0]                                    # 1 in the module
    other_rows = jnp.transpose(other_nchw, (0, 2, 3, 1)).astype(jnp.float32)
    bias_other = (other_rows + bias).reshape(Nb, H, W * Cout)
    bias_other = jnp.broadcast_to(bias_other, (N, H, W * Cout)).reshape(N * H, W * Cout)

    flops = 2 * (N * H) * K * WC
    bytes_accessed = (x_im2row.size * x_im2row.dtype.itemsize
                      + w_slab.size * w_slab.dtype.itemsize
                      + bias_other.size * 4
                      + N * H * WC * 4)

    out_rows = pl.pallas_call(
        _conv_bias_relu_kernel,
        out_shape=jax.ShapeDtypeStruct((N * H, WC), jnp.float32),
        in_specs=[pl.BlockSpec(memory_space=pltpu.MemorySpace.VMEM)] * 3,
        out_specs=pl.BlockSpec(memory_space=pltpu.MemorySpace.VMEM),
        cost_estimate=pl.CostEstimate(flops=flops, transcendentals=0,
                                      bytes_accessed=bytes_accessed),
    )(x_im2row, w_slab, bias_other)

    out_nhwc = out_rows.reshape(N, H, W, Cout)                  # free contiguous reshape
    return jnp.transpose(out_nhwc, (0, 3, 1, 2)).astype(x_nchw.dtype)  # back to NCHW


def reference_forward(x_nchw, other_nchw, conv_w_oihw, conv_b, extra_bias):
    """Plain-JAX f32 reference for correctness checking."""
    v1 = lax.conv_general_dilated(
        x_nchw, conv_w_oihw, window_strides=(1, 1), padding=((1, 1), (1, 1)),
        dimension_numbers=("NCHW", "OIHW", "NCHW"))
    v1 = v1 + conv_b.reshape(1, -1, 1, 1)
    v2 = v1 + extra_bias
    return jnp.maximum(v2 + other_nchw, 0.0)


if __name__ == "__main__":
    key = jax.random.PRNGKey(0)
    k_x, k_o, k_w, k_cb, k_b = jax.random.split(key, 5)

    N, Cin, Cout, H, W = 2, 3, 8, 16, 16
    x = jax.random.normal(k_x, (N, Cin, H, W), jnp.float32)
    other = jax.random.normal(k_o, (1, Cout, H, W), jnp.float32)

    # Deterministic "parameters" (module __init__ shapes).
    conv_w = jax.random.normal(k_w, (Cout, Cin, 3, 3), jnp.float32) * 0.1
    conv_b = jax.random.normal(k_cb, (Cout,), jnp.float32) * 0.1
    extra_bias = jax.random.normal(k_b, (1, Cout, 1, 1), jnp.float32)

    # One-time parameter prep (NOT in the per-call hot path).
    w_slab, bias = prepare_params(conv_w, conv_b, extra_bias, W)
    w_slab = jax.block_until_ready(w_slab)

    out = model_forward(x, other, w_slab, bias)
    out = jax.block_until_ready(out)

    ref = reference_forward(x, other, conv_w, conv_b, extra_bias)
    assert out.shape == (N, Cout, H, W)
    # bf16 MXU operands with f32 accumulation -> bf16-typical tolerance.
    assert jnp.allclose(out, ref, rtol=2e-2, atol=2e-2), "mismatch vs reference"

    print("KERNEL_OK")
</pallas_src>

<mosaic_0001>
module attributes {stable_mosaic.version = 11 : i64} {
  func.func @_conv_bias_relu_kernel(%arg0: memref<32x162xbf16, #tpu.memory_space<vmem>>, %arg1: memref<162x128xbf16, #tpu.memory_space<vmem>>, %arg2: memref<32x128xf32, #tpu.memory_space<vmem>>, %arg3: memref<32x128xf32, #tpu.memory_space<vmem>>) attributes {dimension_semantics = [], scalar_prefetch = 0 : i64, scratch_operands = 0 : i64, tpu.core_type = #tpu.core_type<tc>} {
    %c0 = arith.constant 0 : index
    %c0_0 = arith.constant 0 : index
    %0 = vector.load %arg0[%c0, %c0_0] : memref<32x162xbf16, #tpu.memory_space<vmem>>, vector<32x162xbf16>
    %c0_1 = arith.constant 0 : index
    %c0_2 = arith.constant 0 : index
    %1 = vector.load %arg1[%c0_1, %c0_2] : memref<162x128xbf16, #tpu.memory_space<vmem>>, vector<162x128xbf16>
    %cst = arith.constant dense<0.000000e+00> : vector<32x128xf32>
    %2 = tpu.matmul %0, %1, %cst {dimension_numbers = #tpu.dot_dimension_numbers<[1], [0], [0], [1], [0, 0, 1, 1], [], []>} : vector<32x162xbf16>, vector<162x128xbf16>, vector<32x128xf32> -> vector<32x128xf32>
    %c0_3 = arith.constant 0 : index
    %c0_4 = arith.constant 0 : index
    %3 = vector.load %arg2[%c0_3, %c0_4] : memref<32x128xf32, #tpu.memory_space<vmem>>, vector<32x128xf32>
    %4 = arith.addf %2, %3 : vector<32x128xf32>
    %cst_5 = arith.constant 0.000000e+00 : f32
    %5 = vector.broadcast %cst_5 : f32 to vector<32x128xf32>
    %6 = arith.maximumf %4, %5 : vector<32x128xf32>
    %c0_6 = arith.constant 0 : index
    %c0_7 = arith.constant 0 : index
    %7 = vector.load %arg3[%c0_6, %c0_7] : memref<32x128xf32, #tpu.memory_space<vmem>>, vector<32x128xf32>
    tpu.vector_store %arg3[%c0_6, %c0_7], %6 {strides = array<i32>} : memref<32x128xf32, #tpu.memory_space<vmem>>, vector<32x128xf32>,
    return
  }
}

</mosaic_0001>

<llo_original>
// kernel: model_forward.1
$region0: #{model_forward.1}
  #allocation0 [shape = 'u32[]', space=smem, size = 0x4, offset = 0x4, fixed_abs, tag = 'smem constant byte address 0x4 - core index']
  #allocation1 [shape = 'u32[72,128]{1,0:T(1,128)}', space=vmem, size = 0x9000, scoped, tag = 'internal scratch']
  %s0 = inlined_call_operand.vmem [shape: bf16[32,162], index: 0, kind: input, shape index: {}]
  %s1 = inlined_call_operand.vmem [shape: bf16[162,128], index: 1, kind: input, shape index: {}]
  %s2 = inlined_call_operand.vmem [shape: f32[32,128], index: 2, kind: input, shape index: {}]
  %s3 = inlined_call_operand.vmem [shape: f32[32,128], index: 3, kind: output, shape index: {}]
  %s4 = sld [smem:[#allocation0]]
  $region22: #{model_forward.1} parent=0
    _
  %s6 = ssub.s32 1, %s4
  %s7 = scalar_select 0, %s6, %s4
  // Predicated region
  $region2: #{model_forward.1} parent=0 // pred_check
    _
  $region3: #{model_forward.1} parent=0 // pred_check_branch
    %9 = sbr.rel (0) target = $region5
  $region4: #{model_forward.1} parent=0 // pred_region
    _
  $region5: #{model_forward.1} parent=0 // pred_fallthru
    _
  // Predicated region
  $region6: #{model_forward.1} parent=0 // pred_check
    _
  $region7: #{model_forward.1} parent=0 // pred_check_branch
    %11 = sbr.rel (0) target = $region9
  $region8: #{model_forward.1} parent=0 // pred_region
    _
  $region9: #{model_forward.1} parent=0 // pred_fallthru
    _
  // Predicated region
  $region10: #{model_forward.1} parent=0 // pred_check
    _
  $region11: #{model_forward.1} parent=0 // pred_check_branch
    %13 = sbr.rel (0) target = $region13
  $region12: #{model_forward.1} parent=0 // pred_region
    _
  $region13: #{model_forward.1} parent=0 // pred_fallthru
    _
  %v15 = vld [vmem:[%s0] sm:$0xff]
  %v16 = vld [vmem:[%s0 + $0x8] sm:$0xff]
  %v17 = vld [vmem:[%s0 + $0x10] sm:$0xff]
  %v18 = vld [vmem:[%s0 + $0x18] sm:$0xff]
  %v19 = vld [vmem:[%s1] sm:$0xf]
  %v20 = vld [vmem:[%s1 + $0x4] sm:$0xf]
  %v21 = vld [vmem:[%s1 + $0x8] sm:$0xf]
  %v22 = vld [vmem:[%s1 + $0xc] sm:$0xf]
  %v23 = vld [vmem:[%s1 + $0x10] sm:$0xf]
  %v24 = vld [vmem:[%s1 + $0x14] sm:$0xf]
  %v25 = vld [vmem:[%s1 + $0x18] sm:$0xf]
  %v26 = vld [vmem:[%s1 + $0x1c] sm:$0xf]
  %v27 = vld [vmem:[%s1 + $0x20] sm:$0xf]
  %v28 = vld [vmem:[%s1 + $0x24] sm:$0xf]
  %v29 = vld [vmem:[%s1 + $0x28] sm:$0xf]
  %v30 = vld [vmem:[%s1 + $0x2c] sm:$0xf]
  %v31 = vld [vmem:[%s1 + $0x30] sm:$0xf]
  %v32 = vld [vmem:[%s1 + $0x34] sm:$0xf]
  %v33 = vld [vmem:[%s1 + $0x38] sm:$0xf]
  %v34 = vld [vmem:[%s1 + $0x3c] sm:$0xf]
  %v35 = vld [vmem:[%s1 + $0x40] sm:$0xf]
  %v36 = vld [vmem:[%s1 + $0x44] sm:$0xf]
  %v37 = vld [vmem:[%s1 + $0x48] sm:$0xf]
  %v38 = vld [vmem:[%s1 + $0x4c] sm:$0xf]
  %v39 = vld [vmem:[%s1 + $0x50] sm:$0x1]
  %v40 = vld [vmem:[%s2] sm:$0xff]
  %v41 = vld [vmem:[%s2 + $0x8] sm:$0xff]
  %v42 = vld [vmem:[%s2 + $0x10] sm:$0xff]
  %v43 = vld [vmem:[%s2 + $0x18] sm:$0xff]
  %v48 = vunpack.c.l.b16 %v15
  %v49 = vunpack.c.h.b16 %v15
  %v50 = vunpack.c.l.b16 %v16
  %v51 = vunpack.c.h.b16 %v16
  %v52 = vunpack.c.l.b16 %v17
  %v53 = vunpack.c.h.b16 %v17
  %v54 = vunpack.c.l.b16 %v18
  %v55 = vunpack.c.h.b16 %v18
  %v56 = vpack.c.b16 %v50, %v48
  %v57 = vpack.c.b16 %v51, %v49
  %v58 = vpack.c.b16 %v54, %v52
  %v59 = vpack.c.b16 %v55, %v53
  %v83 = vunpack.c.l.b16 %v19
  %v84 = vunpack.c.l.b16 %v20
  %v85 = vunpack.c.l.b16 %v21
  %v86 = vunpack.c.l.b16 %v22
  %v87 = vunpack.c.l.b16 %v23
  %v88 = vunpack.c.l.b16 %v24
  %v89 = vunpack.c.l.b16 %v25
  %v90 = vunpack.c.l.b16 %v26
  %v91 = vunpack.c.l.b16 %v27
  %v92 = vunpack.c.l.b16 %v28
  %v93 = vunpack.c.l.b16 %v29
  %v94 = vunpack.c.l.b16 %v30
  %v95 = vunpack.c.l.b16 %v31
  %v96 = vunpack.c.l.b16 %v32
  %v97 = vunpack.c.l.b16 %v33
  %v98 = vunpack.c.l.b16 %v34
  %v99 = vunpack.c.l.b16 %v35
  %v100 = vunpack.c.l.b16 %v36
  %v101 = vunpack.c.l.b16 %v37
  %v102 = vunpack.c.l.b16 %v38
  %v103 = vunpack.c.l.b16 %v39
  %v104 = vpack.c.b16 %v84, %v83
  %v105 = vpack.c.b16 %v86, %v85
  %v106 = vpack.c.b16 %v88, %v87
  %v107 = vpack.c.b16 %v90, %v89
  %v108 = vpack.c.b16 %v92, %v91
  %v109 = vpack.c.b16 %v94, %v93
  %v110 = vpack.c.b16 %v96, %v95
  %v111 = vpack.c.b16 %v98, %v97
  %v112 = vpack.c.b16 %v100, %v99
  %v113 = vpack.c.b16 %v102, %v101
  %v114 = vpack.c.b16 %v103, %v103
  %vm125 = vcmask 277504
  %v127 = vsel %vm125, %v57, 0
  %v130 = vsel %vm125, %v59, 0
  %vm132 = vcmask 1040384
  %v134 = vsel %vm132, %v114, 0
  %136 = vmatpush.bf16.msra.mxu0 %v111
  %137 = vmatpush.bf16.msra.mxu0 %v110
  %138 = vmatpush.bf16.msra.mxu0 %v109
  %139 = vmatpush.bf16.msra.mxu0 %v108
  %140 = vmatpush.bf16.msra.mxu0 %v107
  %141 = vmatpush.bf16.msra.mxu0 %v106
  %142 = vmatpush.bf16.msra.mxu0 %v105
  %143 = vmatpush.bf16.msra.mxu0 %v104
  %144 = vmatmul.bf16.gmra.mxu0 %v56
  %v145 = vpop.f32.mrf.mxu0
  %v146 = vadd.f32 %v40, %v145
  %v147 = vpop.f32.mrf.mxu0
  %v148 = vadd.f32 %v41, %v147
  %149 = vmatmul.bf16.gmra.mxu0 %v58
  %v150 = vpop.f32.mrf.mxu0
  %v151 = vadd.f32 %v42, %v150
  %v152 = vpop.f32.mrf.mxu0
  %v153 = vadd.f32 %v43, %v152
  %154 = vdwg.mxu0
  %155 = vmatpush.bf16.msra.mxu0 0
  %156 = vmatpush.bf16.msra.mxu0 0
  %157 = vmatpush.bf16.msra.mxu0 0
  %158 = vmatpush.bf16.msra.mxu0 0
  %159 = vmatpush.bf16.msra.mxu0 0
  %160 = vmatpush.bf16.msra.mxu0 %v134
  %161 = vmatpush.bf16.msra.mxu0 %v113
  %162 = vmatpush.bf16.msra.mxu0 %v112
  %163 = vmatmul.bf16.gmra.mxu0 %v127
  %v164 = vpop.f32.mrf.mxu0
  %v165 = vadd.f32 %v146, %v164
  %v166 = vpop.f32.mrf.mxu0
  %v167 = vadd.f32 %v148, %v166
  %168 = vmatmul.bf16.gmra.mxu0 %v130
  %v169 = vpop.f32.mrf.mxu0
  %v170 = vadd.f32 %v151, %v169
  %v171 = vpop.f32.mrf.mxu0
  %v172 = vadd.f32 %v153, %v171
  %173 = vdwg.mxu0
  %v174 = vmax.f32 %v165, 0.0
  %v175 = vmax.f32 %v167, 0.0
  %v176 = vmax.f32 %v170, 0.0
  %v177 = vmax.f32 %v172, 0.0
  %178 = vst [vmem:[%s3] sm:$0xff] %v174
  %179 = vst [vmem:[%s3 + $0x8] sm:$0xff] %v175
  %180 = vst [vmem:[%s3 + $0x10] sm:$0xff] %v176
  %181 = vst [vmem:[%s3 + $0x18] sm:$0xff] %v177
  // Predicated region
  $region14: #{model_forward.1} parent=0 // pred_check
    _
  $region15: #{model_forward.1} parent=0 // pred_check_branch
    %183 = sbr.rel (0) target = $region17
  $region16: #{model_forward.1} parent=0 // pred_region
    _
  $region17: #{model_forward.1} parent=0 // pred_fallthru
    _
  // Predicated region
  $region18: #{model_forward.1} parent=0 // pred_check
    _
  $region19: #{model_forward.1} parent=0 // pred_check_branch
    %185 = sbr.rel (0) target = $region21
  $region20: #{model_forward.1} parent=0 // pred_region
    _
  $region21: #{model_forward.1} parent=0 // pred_fallthru
    _

</llo_original>
